<compile_context>
chip_gen: v5e
topology: v5e:2x2
jax: 0.10.0
libtpu: 0.0.40
codegen_flags: <defaults>
</compile_context>

<pallas_src>
import functools

import jax
import jax.numpy as jnp
import numpy as np
from jax.experimental import pallas as pl
from jax.experimental.pallas import tpu as pltpu


def _round_up(x, m):
    return (x + m - 1) // m * m


def pred_network_kernel(x_ref, wh_ref, bh_ref, wf_ref, bf_ref, o_ref, *, num_hidden):
    """Fused forward for one (batch, L-tile) block.

    x_ref : (C, tl)              input tile: channels on sublanes, length on lanes
    wh_ref: (max(nh,1), C, C)    hidden weights, torch (out_c, in_c) order
    bh_ref: (max(nh,1), C, 1)    hidden biases as columns (f32, broadcast over lanes)
    wf_ref: (1, C)               final weight row
    bf_ref: (1,)   [SMEM]        final bias scalar (f32)
    o_ref : (1, tl)              output tile (lane-dense)
    """
    h = x_ref[...]                                                 # (C, tl)
    for i in range(num_hidden):
        acc = jnp.dot(wh_ref[i], h, preferred_element_type=jnp.float32)  # (C, tl) f32
        acc = acc + bh_ref[i]                                      # f32 bias (lane bcast)
        h = jnp.maximum(acc, 0.0).astype(x_ref.dtype)              # back to compute dtype
    y = jnp.dot(wf_ref[...], h, preferred_element_type=jnp.float32) + bf_ref[0]
    o_ref[...] = y.astype(o_ref.dtype)                             # (1, tl)


def pred_network_forward(x_ncl, w_hidden, b_hidden, w_final, b_final,
                         *, max_tile_l=2048, compute_dtype=jnp.bfloat16):
    """x_ncl: (N, C, L) f32 -> (N, 1, L) f32, matching the torch module."""
    N, C, L = x_ncl.shape
    num_hidden = w_hidden.shape[0]
    assert C % 8 == 0, "channel count must be a multiple of 8"
    # TODO(synk): pad the channel dim for arbitrary (non multiple-of-8) channel counts.

    # Tile the length axis (lanes). Pad L up to a multiple of the tile.
    tl = min(max_tile_l, _round_up(L, 128))
    L_pad = _round_up(L, tl)
    if L_pad != L:
        x_ncl = jnp.pad(x_ncl, ((0, 0), (0, 0), (0, L_pad - L)))

    x_c = x_ncl.astype(compute_dtype)
    wh = w_hidden.astype(compute_dtype)                 # (nh, C, C)  torch (out, in)
    bh = b_hidden.astype(jnp.float32)                   # (nh, C, 1)
    wf = w_final.astype(compute_dtype)                  # (1, C)
    bf = b_final.reshape(1).astype(jnp.float32)         # (1,)  -> SMEM scalar

    if num_hidden == 0:                                 # keep block shapes non-empty
        wh = jnp.zeros((1, C, C), compute_dtype)
        bh = jnp.zeros((1, C, 1), jnp.float32)
    nh_blocks = max(num_hidden, 1)

    grid = (N, L_pad // tl)
    out = pl.pallas_call(
        functools.partial(pred_network_kernel, num_hidden=num_hidden),
        out_shape=jax.ShapeDtypeStruct((N, 1, L_pad), jnp.float32),
        grid_spec=pltpu.PrefetchScalarGridSpec(
            num_scalar_prefetch=0,
            grid=grid,
            in_specs=[
                pl.BlockSpec((None, C, tl), lambda n, l: (n, 0, l)),        # x tile
                pl.BlockSpec((nh_blocks, C, C), lambda n, l: (0, 0, 0)),    # hidden W
                pl.BlockSpec((nh_blocks, C, 1), lambda n, l: (0, 0, 0)),    # hidden b
                pl.BlockSpec((1, C), lambda n, l: (0, 0)),                  # final W row
                pl.BlockSpec(memory_space=pltpu.MemorySpace.SMEM),          # final b scalar
            ],
            out_specs=pl.BlockSpec((None, 1, tl), lambda n, l: (n, 0, l)),
        ),
        compiler_params=pltpu.CompilerParams(
            dimension_semantics=("parallel", "parallel"),
        ),
    )(x_c, wh, bh, wf, bf)

    return out[:, :, :L] if L_pad != L else out


def init_params(key, channels, layers):
    """Deterministic synthetic parameters matching nn.Conv1d shapes (k=1)."""
    num_hidden = layers - 1
    keys = jax.random.split(key, 2 * num_hidden + 2)
    bound = 1.0 / np.sqrt(channels)  # torch Conv1d default init bound (fan_in = C*1)

    if num_hidden > 0:
        w_hidden = jnp.stack([
            jax.random.uniform(keys[i], (channels, channels), jnp.float32, -bound, bound)
            for i in range(num_hidden)
        ])
        b_hidden = jnp.stack([
            jax.random.uniform(keys[num_hidden + i], (channels, 1), jnp.float32, -bound, bound)
            for i in range(num_hidden)
        ])
    else:
        w_hidden = jnp.zeros((0, channels, channels), jnp.float32)
        b_hidden = jnp.zeros((0, channels, 1), jnp.float32)

    # Final conv: (out=1, in=C, k=1) -> (1, C) row; bias -> (1,)
    w_final = jax.random.uniform(keys[-2], (1, channels), jnp.float32, -bound, bound)
    b_final = jax.random.uniform(keys[-1], (1,), jnp.float32, -bound, bound)
    return w_hidden, b_hidden, w_final, b_final


def reference_forward_np(x_ncl, w_hidden, b_hidden, w_final, b_final):
    """Exact (float64) host reference with identical semantics (NCL in, N1L out)."""
    h = np.asarray(x_ncl, np.float64)
    wh = np.asarray(w_hidden, np.float64)
    bh = np.asarray(b_hidden, np.float64)
    wf = np.asarray(w_final, np.float64)
    bf = np.asarray(b_final, np.float64)
    for i in range(wh.shape[0]):
        h = np.einsum("oi,nil->nol", wh[i], h) + bh[i][None, :, :]
        h = np.maximum(h, 0.0)
    y = np.einsum("oi,nil->nol", wf, h) + bf.reshape(1, 1, 1)
    return y.astype(np.float32)


def _run_case(key, channels, layers, N, L):
    k_x, k_p = jax.random.split(key)
    x = jax.random.normal(k_x, (N, channels, L), jnp.float32)
    params = init_params(k_p, channels, layers)

    out = pred_network_forward(x, *params)
    out = jax.block_until_ready(out)
    assert out.shape == (N, 1, L)

    ref = reference_forward_np(np.asarray(x), *[np.asarray(p) for p in params])
    # bf16 matmul inputs (f32 accumulation) -> relaxed tolerance vs exact reference.
    np.testing.assert_allclose(np.asarray(out), ref, rtol=5e-2, atol=1e-1)


if __name__ == "__main__":
    key = jax.random.PRNGKey(0)
    k1, k2 = jax.random.split(key)

    # Main case: 2 hidden Conv1d(k=1)+ReLU layers + final 1-channel conv.
    _run_case(k1, channels=32, layers=3, N=2, L=256)
    # Edge case: no hidden layers (layers=1) and an unaligned length (padding path).
    _run_case(k2, channels=32, layers=1, N=2, L=200)

    print("KERNEL_OK")
</pallas_src>

<mosaic_0001>
module attributes {stable_mosaic.version = 11 : i64} {
  func.func @pred_network_kernel(%arg0: i32, %arg1: i32, %arg2: memref<1x32x256xbf16, #tpu.memory_space<vmem>>, %arg3: memref<2x32x32xbf16, #tpu.memory_space<vmem>>, %arg4: memref<2x32x1xf32, #tpu.memory_space<vmem>>, %arg5: memref<1x32xbf16, #tpu.memory_space<vmem>>, %arg6: memref<1xf32, #tpu.memory_space<smem>>, %arg7: memref<1x1x256xf32, #tpu.memory_space<vmem>>) attributes {dimension_semantics = [#tpu.dimension_semantics<parallel>, #tpu.dimension_semantics<parallel>], iteration_bounds = array<i64: 2, 1>, scalar_prefetch = 0 : i64, scratch_operands = 0 : i64, tpu.core_type = #tpu.core_type<tc>, window_params = [{transform_indices = @transform_0, window_bounds = array<i64: 1, 32, 256>}, {pipeline_mode = #tpu.pipeline_mode<synchronous>, transform_indices = @transform_1, window_bounds = array<i64: 2, 32, 32>}, {pipeline_mode = #tpu.pipeline_mode<synchronous>, transform_indices = @transform_2, window_bounds = array<i64: 2, 32, 1>}, {pipeline_mode = #tpu.pipeline_mode<synchronous>, transform_indices = @transform_3, window_bounds = array<i64: 1, 32>}, {transform_indices = @transform_4, window_bounds = array<i64: 1>}, {transform_indices = @transform_5, window_bounds = array<i64: 1, 1, 256>}]} {
    %c0 = arith.constant 0 : index
    %c0_0 = arith.constant 0 : index
    %c0_1 = arith.constant 0 : index
    %0 = vector.load %arg2[%c0, %c0_0, %c0_1] : memref<1x32x256xbf16, #tpu.memory_space<vmem>>, vector<1x32x256xbf16>
    %1 = vector.shape_cast %0 : vector<1x32x256xbf16> to vector<32x256xbf16>
    %c0_2 = arith.constant 0 : index
    %c0_3 = arith.constant 0 : index
    %c0_4 = arith.constant 0 : index
    %2 = vector.load %arg3[%c0_2, %c0_3, %c0_4] : memref<2x32x32xbf16, #tpu.memory_space<vmem>>, vector<1x32x32xbf16>
    %3 = vector.shape_cast %2 : vector<1x32x32xbf16> to vector<32x32xbf16>
    %cst = arith.constant dense<0.000000e+00> : vector<32x256xf32>
    %4 = tpu.matmul %3, %1, %cst {dimension_numbers = #tpu.dot_dimension_numbers<[1], [0], [0], [1], [0, 0, 1, 1], [], []>} : vector<32x32xbf16>, vector<32x256xbf16>, vector<32x256xf32> -> vector<32x256xf32>
    %c0_5 = arith.constant 0 : index
    %c0_6 = arith.constant 0 : index
    %c0_7 = arith.constant 0 : index
    %5 = vector.load %arg4[%c0_5, %c0_6, %c0_7] : memref<2x32x1xf32, #tpu.memory_space<vmem>>, vector<1x32x1xf32>
    %6 = vector.shape_cast %5 : vector<1x32x1xf32> to vector<32x1xf32>
    %7 = vector.broadcast %6 : vector<32x1xf32> to vector<32x256xf32>
    %8 = arith.addf %4, %7 : vector<32x256xf32>
    %cst_8 = arith.constant 0.000000e+00 : f32
    %9 = vector.broadcast %cst_8 : f32 to vector<32x256xf32>
    %10 = arith.maximumf %8, %9 : vector<32x256xf32>
    %11 = arith.truncf %10 : vector<32x256xf32> to vector<32x256xbf16>
    %c1 = arith.constant 1 : index
    %c0_9 = arith.constant 0 : index
    %c0_10 = arith.constant 0 : index
    %12 = vector.load %arg3[%c1, %c0_9, %c0_10] : memref<2x32x32xbf16, #tpu.memory_space<vmem>>, vector<1x32x32xbf16>
    %13 = vector.shape_cast %12 : vector<1x32x32xbf16> to vector<32x32xbf16>
    %cst_11 = arith.constant dense<0.000000e+00> : vector<32x256xf32>
    %14 = tpu.matmul %13, %11, %cst_11 {dimension_numbers = #tpu.dot_dimension_numbers<[1], [0], [0], [1], [0, 0, 1, 1], [], []>} : vector<32x32xbf16>, vector<32x256xbf16>, vector<32x256xf32> -> vector<32x256xf32>
    %c1_12 = arith.constant 1 : index
    %c0_13 = arith.constant 0 : index
    %c0_14 = arith.constant 0 : index
    %15 = vector.load %arg4[%c1_12, %c0_13, %c0_14] : memref<2x32x1xf32, #tpu.memory_space<vmem>>, vector<1x32x1xf32>
    %16 = vector.shape_cast %15 : vector<1x32x1xf32> to vector<32x1xf32>
    %17 = vector.broadcast %16 : vector<32x1xf32> to vector<32x256xf32>
    %18 = arith.addf %14, %17 : vector<32x256xf32>
    %cst_15 = arith.constant 0.000000e+00 : f32
    %19 = vector.broadcast %cst_15 : f32 to vector<32x256xf32>
    %20 = arith.maximumf %18, %19 : vector<32x256xf32>
    %21 = arith.truncf %20 : vector<32x256xf32> to vector<32x256xbf16>
    %c0_16 = arith.constant 0 : index
    %c0_17 = arith.constant 0 : index
    %22 = vector.load %arg5[%c0_16, %c0_17] : memref<1x32xbf16, #tpu.memory_space<vmem>>, vector<1x32xbf16>
    %cst_18 = arith.constant dense<0.000000e+00> : vector<1x256xf32>
    %23 = tpu.matmul %22, %21, %cst_18 {dimension_numbers = #tpu.dot_dimension_numbers<[1], [0], [0], [1], [0, 0, 1, 1], [], []>} : vector<1x32xbf16>, vector<32x256xbf16>, vector<1x256xf32> -> vector<1x256xf32>
    %c0_19 = arith.constant 0 : index
    %24 = memref.load %arg6[%c0_19] : memref<1xf32, #tpu.memory_space<smem>>
    %25 = vector.broadcast %24 : f32 to vector<1x256xf32>
    %26 = arith.addf %23, %25 : vector<1x256xf32>
    %c0_20 = arith.constant 0 : index
    %c0_21 = arith.constant 0 : index
    %c0_22 = arith.constant 0 : index
    %27 = vector.load %arg7[%c0_20, %c0_21, %c0_22] : memref<1x1x256xf32, #tpu.memory_space<vmem>>, vector<1x1x256xf32>
    %28 = vector.shape_cast %27 : vector<1x1x256xf32> to vector<1x256xf32>
    %29 = vector.shape_cast %26 : vector<1x256xf32> to vector<1x1x256xf32>
    tpu.vector_store %arg7[%c0_20, %c0_21, %c0_22], %29 {strides = array<i32>} : memref<1x1x256xf32, #tpu.memory_space<vmem>>, vector<1x1x256xf32>,
    return
  }
  func.func @transform_0(%arg0: i32, %arg1: i32) -> (i32, i32, i32) {
    %c0_i32 = arith.constant 0 : i32
    %c0_i32_0 = arith.constant 0 : i32
    return %arg0, %c0_i32, %arg1 : i32, i32, i32
  }
  func.func @transform_1(%arg0: i32, %arg1: i32) -> (i32, i32, i32) {
    %c0_i32 = arith.constant 0 : i32
    %c0_i32_0 = arith.constant 0 : i32
    %c0_i32_1 = arith.constant 0 : i32
    %c0_i32_2 = arith.constant 0 : i32
    return %c0_i32, %c0_i32_0, %c0_i32_1 : i32, i32, i32
  }
  func.func @transform_2(%arg0: i32, %arg1: i32) -> (i32, i32, i32) {
    %c0_i32 = arith.constant 0 : i32
    %c0_i32_0 = arith.constant 0 : i32
    %c0_i32_1 = arith.constant 0 : i32
    %c0_i32_2 = arith.constant 0 : i32
    return %c0_i32, %c0_i32_0, %c0_i32_1 : i32, i32, i32
  }
  func.func @transform_3(%arg0: i32, %arg1: i32) -> (i32, i32) {
    %c0_i32 = arith.constant 0 : i32
    %c0_i32_0 = arith.constant 0 : i32
    %c0_i32_1 = arith.constant 0 : i32
    return %c0_i32, %c0_i32_0 : i32, i32
  }
  func.func @transform_4(%arg0: i32, %arg1: i32) -> i32 {
    %c0_i32 = arith.constant 0 : i32
    %c0_i32_0 = arith.constant 0 : i32
    return %c0_i32 : i32
  }
  func.func @transform_5(%arg0: i32, %arg1: i32) -> (i32, i32, i32) {
    %c0_i32 = arith.constant 0 : i32
    %c0_i32_0 = arith.constant 0 : i32
    return %arg0, %c0_i32, %arg1 : i32, i32, i32
  }
}

</mosaic_0001>

<llo_original>
// kernel: tpu_custom_call.1
$region0: #{tpu_custom_call.1}
  #allocation0 [shape = 'u32[]', space=smem, size = 0x4, offset = 0x4, fixed_abs, tag = 'smem constant byte address 0x4 - core index']
  #allocation1 [shape = 'u32[72,128]{1,0:T(1,128)}', space=vmem, size = 0x9000, scoped, tag = 'internal scratch']
  #allocation2 [shape = 'f32[1]{0:T(128)S(6)}', space=smem, size = 0x200, scoped, tag = 'scoped memory for tpu_custom_call.1']
  %s0 = inlined_call_operand.vmem [shape: bf16[2,32,256], index: 0, kind: input, shape index: {}]
  %s1 = inlined_call_operand.hbm [shape: bf16[2,32,32], index: 1, kind: input, shape index: {}]
  %s2 = inlined_call_operand.vmem [shape: f32[2,32,1], index: 2, kind: input, shape index: {}]
  %s3 = inlined_call_operand.vmem [shape: bf16[1,32], index: 3, kind: input, shape index: {}]
  %s4 = inlined_call_operand.<no memory space> [shape: f32[1], index: 4, kind: input, shape index: {}]
  %s5 = inlined_call_operand.hbm [shape: f32[2,1,256], index: 5, kind: output, shape index: {}]
  %s6 = sld [smem:[#allocation0]]
  $region57: #{tpu_custom_call.1} parent=0
    _
  %s8 = ssub.s32 1, %s6
  %s9 = scalar_select 0, %s8, %s6
  %10 = sst [smem:[#allocation2]] %s4
  $region1: #{tpu_custom_call.1} parent=0
    #allocation3 [shape = 'u8[16384]{0}', space=vmem, size = 0x4000, scoped, tag = 'input window, operand 1, single buffered']
    #allocation4 [shape = 's32[2]{0}', space=sflag, size = 0x8, scoped, tag = 'scoped memory for tpu_custom_call.1']
    #allocation5 [shape = 's32[2]{0}', space=sflag, size = 0x8, scoped, tag = 'scoped memory for tpu_custom_call.1']
    #allocation6 [shape = 'u8[2048]{0}', space=vmem, size = 0x800, scoped, tag = 'output window, operand 0']
    %11 = vsyncpa [#allocation4], 0
    %12 = vsyncpa [#allocation5], 0
    %s13 = scalar_lea.sflag [#allocation5], 1
    %14 = vsyncpa %s13, 0
    loop: start=0, step=1, limit=4
    $region2: #{tpu_custom_call.1} parent=1 // loop_pre_header
      _
    $region3: #{tpu_custom_call.1} parent=1 // loop_header
      %s16 = sphi 0, %s20
      %p17 = scmp.ge.s32.totalorder %s16, 4
      %s23 = sphi 0, %s35
      %s24 = sphi 0, %s31
      %s25 = sphi 0, %s23
      %s26 = sphi 0, %s24
      %s27 = sphi 0, %s25
      %s28 = sphi 0, %s26
      %s40 = sphi 0, %s42
      %s43 = sphi 0, %s40
      %s44 = sphi 0, %s43
      %s60 = sphi 0, %s44
      %s64 = sphi 0, %s64
      %s66 = sphi 0, %s64
      %s67 = sphi 0, %s66
      %s81 = sphi 0, %s67
      %s85 = sphi 0, %s85
      %s87 = sphi 0, %s85
      %s88 = sphi 0, %s87
      %s102 = sphi 0, %s88
      %s106 = sphi 0, %s106
      %s108 = sphi 0, %s106
      %s109 = sphi 0, %s108
      %s123 = sphi 0, %s109
      %s127 = sphi 0, %s127
      %s129 = sphi 0, %s127
      %s130 = sphi 0, %s129
      %s144 = sphi 0, %s130
      %s152 = sphi 0, %s154
      %s155 = sphi 0, %s152
      %s156 = sphi 0, %s155
      %s172 = sphi 0, %s156
    $region4: #{tpu_custom_call.1} parent=1 // loop_header_branch
      %19 = sbr.rel (%p17) target = $region8
    $region5: #{tpu_custom_call.1} parent=1 // loop_body
      %s21 = ssub.s32 %s16, 1
      %s22 = ssub.s32 %s16, 2
      %s29 = sadd.s32 1, %s24
      %p30 = scmp.ge.s32.totalorder %s29, 1
      %s31 = scalar_select %p30, 0, %s29
      %s32 = sadd.s32 1, %s23
      %s33 = scalar_select %p30, %s32, %s23
      %p34 = scmp.ge.s32.totalorder %s33, 2
      %s35 = scalar_select %p34, 0, %s33
      %s36 = ssub.s32 %s23, %s35
      %s37 = ssub.s32 %s24, %s31
      %s38 = sor.u32 %s36, %s37
      %p39 = scmp.eq.s32.totalorder %s38, 0
      %s41 = sadd.s32 %s40, 1
      %s42 = scalar_select %p39, %s40, %s41
      %p45 = pneg %p39
      %p46 = scmp.eq.s32.totalorder %s16, 1
      %p47 = por %p45, %p46
      %p48 = scmp.ne.s32.totalorder %s40, %s43
      %p49 = scmp.eq.s32.totalorder %s16, 0
      %p50 = por %p48, %p49
      %p51 = scmp.ne.s32.totalorder %s40, %s43
      %p52 = scmp.eq.s32.totalorder %s21, 1
      %p53 = por %p51, %p52
      %p54 = scmp.ne.s32.totalorder %s43, %s44
      %p55 = scmp.eq.s32.totalorder %s21, 0
      %p56 = por %p54, %p55
      %p57 = scmp.ne.s32.totalorder %s43, %s44
      %p58 = scmp.eq.s32.totalorder %s22, 1
      %p59 = por %p57, %p58
      %p61 = scmp.ne.s32.totalorder %s44, %s60
      %p62 = scmp.eq.s32.totalorder %s22, 0
      %p63 = por %p61, %p62
      %s65 = sadd.s32 %s64, 1
      %p68 = scmp.eq.s32.totalorder %s16, 1
      %p69 = scmp.ne.s32.totalorder %s64, %s66
      %p70 = scmp.eq.s32.totalorder %s16, 0
      %p71 = por %p69, %p70
      %p72 = scmp.ne.s32.totalorder %s64, %s66
      %p73 = scmp.eq.s32.totalorder %s21, 1
      %p74 = por %p72, %p73
      %p75 = scmp.ne.s32.totalorder %s66, %s67
      %p76 = scmp.eq.s32.totalorder %s21, 0
      %p77 = por %p75, %p76
      %p78 = scmp.ne.s32.totalorder %s66, %s67
      %p79 = scmp.eq.s32.totalorder %s22, 1
      %p80 = por %p78, %p79
      %p82 = scmp.ne.s32.totalorder %s67, %s81
      %p83 = scmp.eq.s32.totalorder %s22, 0
      %p84 = por %p82, %p83
      %s86 = sadd.s32 %s85, 1
      %p89 = scmp.eq.s32.totalorder %s16, 1
      %p90 = scmp.ne.s32.totalorder %s85, %s87
      %p91 = scmp.eq.s32.totalorder %s16, 0
      %p92 = por %p90, %p91
      %p93 = scmp.ne.s32.totalorder %s85, %s87
      %p94 = scmp.eq.s32.totalorder %s21, 1
      %p95 = por %p93, %p94
      %p96 = scmp.ne.s32.totalorder %s87, %s88
      %p97 = scmp.eq.s32.totalorder %s21, 0
      %p98 = por %p96, %p97
      %p99 = scmp.ne.s32.totalorder %s87, %s88
      %p100 = scmp.eq.s32.totalorder %s22, 1
      %p101 = por %p99, %p100
      %p103 = scmp.ne.s32.totalorder %s88, %s102
      %p104 = scmp.eq.s32.totalorder %s22, 0
      %p105 = por %p103, %p104
      %s107 = sadd.s32 %s106, 1
      %p110 = scmp.eq.s32.totalorder %s16, 1
      %p111 = scmp.ne.s32.totalorder %s106, %s108
      %p112 = scmp.eq.s32.totalorder %s16, 0
      %p113 = por %p111, %p112
      %p114 = scmp.ne.s32.totalorder %s106, %s108
      %p115 = scmp.eq.s32.totalorder %s21, 1
      %p116 = por %p114, %p115
      %p117 = scmp.ne.s32.totalorder %s108, %s109
      %p118 = scmp.eq.s32.totalorder %s21, 0
      %p119 = por %p117, %p118
      %p120 = scmp.ne.s32.totalorder %s108, %s109
      %p121 = scmp.eq.s32.totalorder %s22, 1
      %p122 = por %p120, %p121
      %p124 = scmp.ne.s32.totalorder %s109, %s123
      %p125 = scmp.eq.s32.totalorder %s22, 0
      %p126 = por %p124, %p125
      %s128 = sadd.s32 %s127, 1
      %p131 = scmp.eq.s32.totalorder %s16, 1
      %p132 = scmp.ne.s32.totalorder %s127, %s129
      %p133 = scmp.eq.s32.totalorder %s16, 0
      %p134 = por %p132, %p133
      %p135 = scmp.ne.s32.totalorder %s127, %s129
      %p136 = scmp.eq.s32.totalorder %s21, 1
      %p137 = por %p135, %p136
      %p138 = scmp.ne.s32.totalorder %s129, %s130
      %p139 = scmp.eq.s32.totalorder %s21, 0
      %p140 = por %p138, %p139
      %p141 = scmp.ne.s32.totalorder %s129, %s130
      %p142 = scmp.eq.s32.totalorder %s22, 1
      %p143 = por %p141, %p142
      %p145 = scmp.ne.s32.totalorder %s130, %s144
      %p146 = scmp.eq.s32.totalorder %s22, 0
      %p147 = por %p145, %p146
      %s148 = ssub.s32 %s23, %s35
      %s149 = ssub.s32 %s24, %s31
      %s150 = sor.u32 %s148, %s149
      %p151 = scmp.eq.s32.totalorder %s150, 0
      %s153 = sadd.s32 %s152, 1
      %s154 = scalar_select %p151, %s152, %s153
      %p157 = pneg %p151
      %p158 = scmp.eq.s32.totalorder %s16, 1
      %p159 = por %p157, %p158
      %p160 = scmp.ne.s32.totalorder %s152, %s155
      %p161 = scmp.eq.s32.totalorder %s16, 0
      %p162 = por %p160, %p161
      %p163 = scmp.ne.s32.totalorder %s152, %s155
      %p164 = scmp.eq.s32.totalorder %s21, 1
      %p165 = por %p163, %p164
      %p166 = scmp.ne.s32.totalorder %s155, %s156
      %p167 = scmp.eq.s32.totalorder %s21, 0
      %p168 = por %p166, %p167
      %p169 = scmp.ne.s32.totalorder %s155, %s156
      %p170 = scmp.eq.s32.totalorder %s22, 1
      %p171 = por %p169, %p170
      %p173 = scmp.ne.s32.totalorder %s156, %s172
      %p174 = scmp.eq.s32.totalorder %s22, 0
      %p175 = por %p173, %p174
      %p176 = scmp.le.s32.totalorder 1, %s16
      %p177 = scmp.lt.s32.totalorder %s16, 3
      %p178 = pnand %p176, %p177
      %p179 = pneg %p178
      // Predicated region
      $region9: #{tpu_custom_call.1} parent=5 // pred_check
        _
      $region10: #{tpu_custom_call.1} parent=5 // pred_check_branch
        %181 = sbr.rel (%p178) target = $region12
      $region11: #{tpu_custom_call.1} parent=5 // pred_region
        %s182 = ssub.s32 %s16, 1
        // Predicated region
        $region13: #{tpu_custom_call.1} parent=11 // pred_check
          %p183 = pneg %p77
        $region14: #{tpu_custom_call.1} parent=11 // pred_check_branch
          %185 = sbr.rel (%p183) target = $region16
        $region15: #{tpu_custom_call.1} parent=11 // pred_region
          %187 = vsyncadd [#allocation4], 0
          %s188 = sshll.u32 %s1, 4
          %s189 = int_to_ptr.hbm [resolvable:$true] %s188
          %s190 = sshll.u32 [#allocation3], 4
          %s191 = int_to_ptr.vmem [resolvable:$true] %s190
          %196 = dma.hbm_to_vmem [thread:$0]  %s189, 512, %s191, [#allocation4], 64, 64, 4
        $region16: #{tpu_custom_call.1} parent=11 // pred_fallthru
          _
        // Predicated region
        $region17: #{tpu_custom_call.1} parent=11 // pred_check
          %p197 = pneg %p98
        $region18: #{tpu_custom_call.1} parent=11 // pred_check_branch
          %199 = sbr.rel (%p197) target = $region20
        $region19: #{tpu_custom_call.1} parent=11 // pred_region
          _
        $region20: #{tpu_custom_call.1} parent=11 // pred_fallthru
          _
        // Predicated region
        $region21: #{tpu_custom_call.1} parent=11 // pred_check
          %p200 = pneg %p119
        $region22: #{tpu_custom_call.1} parent=11 // pred_check_branch
          %202 = sbr.rel (%p200) target = $region24
        $region23: #{tpu_custom_call.1} parent=11 // pred_region
          _
        $region24: #{tpu_custom_call.1} parent=11 // pred_fallthru
          _
        // Predicated region
        $region25: #{tpu_custom_call.1} parent=11 // pred_check
          %p203 = pneg %p140
        $region26: #{tpu_custom_call.1} parent=11 // pred_check_branch
          %205 = sbr.rel (%p203) target = $region28
        $region27: #{tpu_custom_call.1} parent=11 // pred_region
          _
        $region28: #{tpu_custom_call.1} parent=11 // pred_fallthru
          _
      $region12: #{tpu_custom_call.1} parent=5 // pred_fallthru
        _
      %p206 = scmp.lt.s32.totalorder %s16, 2
      // Predicated region
      $region29: #{tpu_custom_call.1} parent=5 // pred_check
        %p207 = pneg %p206
      $region30: #{tpu_custom_call.1} parent=5 // pred_check_branch
        %209 = sbr.rel (%p207) target = $region32
      $region31: #{tpu_custom_call.1} parent=5 // pred_region
        // Predicated region
        $region33: #{tpu_custom_call.1} parent=31 // pred_check
          %p210 = pneg %p50
        $region34: #{tpu_custom_call.1} parent=31 // pred_check_branch
          %212 = sbr.rel (%p210) target = $region36
        $region35: #{tpu_custom_call.1} parent=31 // pred_region
          %s213 = smul.u32 2, %s24
          %p214 = scmp.lt.s32.totalorder %s23, 1
          %s215 = scalar_select %p214, %s23, 1
          %p216 = scmp.lt.s32.totalorder %s213, 1
          %s217 = scalar_select %p216, %s213, 1
          %s218 = smul.addr %s215, 8
          %s219 = sadd.s32 %s217, %s218
          %s220 = smul.addr %s219, 4
          %s221 = scalar_lea.vmem %s0, %s220
          %s222 = smul.u32 2, %s24
        $region36: #{tpu_custom_call.1} parent=31 // pred_fallthru
          _
      $region32: #{tpu_custom_call.1} parent=5 // pred_fallthru
        _
      %p223 = scmp.le.s32.totalorder 1, %s16
      %p224 = scmp.lt.s32.totalorder %s16, 3
      %p225 = pnand %p223, %p224
      %p226 = pneg %p225
      // Predicated region
      $region37: #{tpu_custom_call.1} parent=5 // pred_check
        _
      $region38: #{tpu_custom_call.1} parent=5 // pred_check_branch
        %228 = sbr.rel (%p225) target = $region40
      $region39: #{tpu_custom_call.1} parent=5 // pred_region
        %s229 = ssub.s32 %s16, 1
        // Predicated region
        $region41: #{tpu_custom_call.1} parent=39 // pred_check
          %p230 = pneg %p77
        $region42: #{tpu_custom_call.1} parent=39 // pred_check_branch
          %232 = sbr.rel (%p230) target = $region44
        $region43: #{tpu_custom_call.1} parent=39 // pred_region
          %234 = dma.done [#allocation4], 512
        $region44: #{tpu_custom_call.1} parent=39 // pred_fallthru
          _
        %s235 = smul.u32 2, %s26
        %p236 = scmp.lt.s32.totalorder %s25, 1
        %s237 = scalar_select %p236, %s25, 1
        %p238 = scmp.lt.s32.totalorder %s235, 1
        %s239 = scalar_select %p238, %s235, 1
        %s240 = smul.addr %s237, 8
        %s241 = sadd.s32 %s239, %s240
        %s242 = smul.addr %s241, 4
        %s243 = scalar_lea.vmem %s0, %s242
        %p244 = pneg %p56
        %p245 = pneg %p53
        %p246 = pneg %p77
        %p247 = pneg %p74
        %p248 = pneg %p98
        %p249 = pneg %p95
        %p250 = pneg %p119
        %p251 = pneg %p116
        %p252 = pneg %p140
        %p253 = pneg %p137
        %p254 = pneg %p168
        %p255 = pneg %p165
        %s256 = sand.u32 %s155, 1
        %s257 = scalar_lea.sflag [#allocation5], %s256
        %s258 = sand.u32 %s155, 1
        %s259 = smul.addr %s258, 2
        %s260 = scalar_lea.vmem [#allocation6], %s259
        %s261 = smul.u32 2, %s26
        %p262 = scmp.lt.s32.totalorder %s25, 1
        %s263 = scalar_select %p262, %s25, 1
        %p264 = scmp.lt.s32.totalorder %s261, 1
        %s265 = scalar_select %p264, %s261, 1
        %s266 = smul.addr %s263, 8
        %s267 = sadd.s32 %s265, %s266
        %s268 = smul.addr %s267, 4
        %s269 = scalar_lea.vmem %s0, %s268
        %s270 = smul.u32 2, %s26
        %s271 = smul.u32 2, %s26
        %v273 = vld [vmem:[%s269] sm:$0xff]
        %v274 = vld [vmem:[%s269 + $0x8] sm:$0xff]
        %v275 = vld [vmem:[%s269 + $0x10] sm:$0xff]
        %v276 = vld [vmem:[%s269 + $0x18] sm:$0xff]
        %v277 = vld [vmem:[#allocation3] sm:$0xf]
        %v278 = vld [vmem:[#allocation3 + $0x4] sm:$0xf]
        %v279 = vld [vmem:[#allocation3 + $0x8] sm:$0xf]
        %v280 = vld [vmem:[#allocation3 + $0xc] sm:$0xf]
        %v281 = vld [vmem:[%s2] sm:$0xff]
        %v282 = vld [vmem:[%s2 + $0x8] sm:$0xff]
        %v283 = vld [vmem:[%s2 + $0x10] sm:$0xff]
        %v284 = vld [vmem:[%s2 + $0x18] sm:$0xff]
        %286 = vset.pattern.permute.xlu0 0
        %287 = vperm.xlu0 %286, %v281
        %v288 = vpop.permute.xlu0 %287
        %291 = vset.pattern.permute.xlu0 0
        %292 = vperm.xlu0 %291, %v282
        %v293 = vpop.permute.xlu0 %292
        %296 = vset.pattern.permute.xlu0 0
        %297 = vperm.xlu0 %296, %v283
        %v298 = vpop.permute.xlu0 %297
        %301 = vset.pattern.permute.xlu0 0
        %302 = vperm.xlu0 %301, %v284
        %v303 = vpop.permute.xlu0 %302
        %v309 = vunpack.c.l.b16 %v277
        %v310 = vunpack.c.l.b16 %v278
        %v311 = vunpack.c.l.b16 %v279
        %v312 = vunpack.c.l.b16 %v280
        %v313 = vpack.c.b16 %v310, %v309
        %v314 = vpack.c.b16 %v312, %v311
        %v319 = vunpack.c.l.b16 %v273
        %v320 = vunpack.c.h.b16 %v273
        %v321 = vunpack.c.l.b16 %v274
        %v322 = vunpack.c.h.b16 %v274
        %v323 = vunpack.c.l.b16 %v275
        %v324 = vunpack.c.h.b16 %v275
        %v325 = vunpack.c.l.b16 %v276
        %v326 = vunpack.c.h.b16 %v276
        %v327 = vpack.c.b16 %v321, %v319
        %v328 = vpack.c.b16 %v322, %v320
        %v329 = vpack.c.b16 %v325, %v323
        %v330 = vpack.c.b16 %v326, %v324
        %vm335 = vcmask 261120
        %v337 = vsel %vm335, %v313, 0
        %v340 = vsel %vm335, %v314, 0
        %342 = vmatpush.bf16.msra.mxu0 0
        %343 = vmatpush.bf16.msra.mxu0 0
        %344 = vmatpush.bf16.msra.mxu0 0
        %345 = vmatpush.bf16.msra.mxu0 0
        %346 = vmatpush.bf16.msra.mxu0 0
        %347 = vmatpush.bf16.msra.mxu0 0
        %348 = vmatpush.bf16.msra.mxu0 %v329
        %349 = vmatpush.bf16.msra.mxu0 %v327
        %350 = vmatmul.bf16.gmra.mxu0 %v337
        %v351 = vpop.f32.mrf.mxu0
        %v352 = vadd.f32 %v288, %v351
        %v353 = vpop.f32.mrf.mxu0
        %v354 = vadd.f32 %v293, %v353
        %355 = vmatmul.bf16.gmra.mxu0 %v340
        %v356 = vpop.f32.mrf.mxu0
        %v357 = vadd.f32 %v298, %v356
        %v358 = vpop.f32.mrf.mxu0
        %v359 = vadd.f32 %v303, %v358
        %360 = vdwg.mxu0
        %361 = vmatpush.bf16.msra.mxu0 0
        %362 = vmatpush.bf16.msra.mxu0 0
        %363 = vmatpush.bf16.msra.mxu0 0
        %364 = vmatpush.bf16.msra.mxu0 0
        %365 = vmatpush.bf16.msra.mxu0 0
        %366 = vmatpush.bf16.msra.mxu0 0
        %367 = vmatpush.bf16.msra.mxu0 %v330
        %368 = vmatpush.bf16.msra.mxu0 %v328
        %369 = vmatmul.bf16.gmra.mxu0 %v337
        %v370 = vpop.f32.mrf.mxu0
        %v371 = vadd.f32 %v288, %v370
        %v372 = vpop.f32.mrf.mxu0
        %v373 = vadd.f32 %v293, %v372
        %374 = vmatmul.bf16.gmra.mxu0 %v340
        %v375 = vpop.f32.mrf.mxu0
        %v376 = vadd.f32 %v298, %v375
        %v377 = vpop.f32.mrf.mxu0
        %v378 = vadd.f32 %v303, %v377
        %379 = vdwg.mxu0
        %v380 = vmax.f32 %v352, 0.0
        %v381 = vmax.f32 %v371, 0.0
        %v382 = vmax.f32 %v354, 0.0
        %v383 = vmax.f32 %v373, 0.0
        %v384 = vmax.f32 %v357, 0.0
        %v385 = vmax.f32 %v376, 0.0
        %v386 = vmax.f32 %v359, 0.0
        %v387 = vmax.f32 %v378, 0.0
        %v388 = vpack.c.bf16 %v382, %v380
        %v389 = vpack.c.bf16 %v383, %v381
        %v390 = vpack.c.bf16 %v386, %v384
        %v391 = vpack.c.bf16 %v387, %v385
        %s392 = scalar_lea.vmem [#allocation3], 16
        %v393 = vld [vmem:[%s392] sm:$0xf]
        %v394 = vld [vmem:[%s392 + $0x4] sm:$0xf]
        %v395 = vld [vmem:[%s392 + $0x8] sm:$0xf]
        %v396 = vld [vmem:[%s392 + $0xc] sm:$0xf]
        %s397 = scalar_lea.vmem %s2, 32
        %v398 = vld [vmem:[%s397] sm:$0xff]
        %v399 = vld [vmem:[%s397 + $0x8] sm:$0xff]
        %v400 = vld [vmem:[%s397 + $0x10] sm:$0xff]
        %v401 = vld [vmem:[%s397 + $0x18] sm:$0xff]
        %403 = vset.pattern.permute.xlu0 0
        %404 = vperm.xlu0 %403, %v398
        %v405 = vpop.permute.xlu0 %404
        %408 = vset.pattern.permute.xlu0 0
        %409 = vperm.xlu0 %408, %v399
        %v410 = vpop.permute.xlu0 %409
        %413 = vset.pattern.permute.xlu0 0
        %414 = vperm.xlu0 %413, %v400
        %v415 = vpop.permute.xlu0 %414
        %418 = vset.pattern.permute.xlu0 0
        %419 = vperm.xlu0 %418, %v401
        %v420 = vpop.permute.xlu0 %419
        %v426 = vunpack.c.l.b16 %v393
        %v427 = vunpack.c.l.b16 %v394
        %v428 = vunpack.c.l.b16 %v395
        %v429 = vunpack.c.l.b16 %v396
        %v430 = vpack.c.b16 %v427, %v426
        %v431 = vpack.c.b16 %v429, %v428
        %v433 = vsel %vm335, %v430, 0
        %v436 = vsel %vm335, %v431, 0
        %438 = vmatpush.bf16.msra.mxu0 0
        %439 = vmatpush.bf16.msra.mxu0 0
        %440 = vmatpush.bf16.msra.mxu0 0
        %441 = vmatpush.bf16.msra.mxu0 0
        %442 = vmatpush.bf16.msra.mxu0 0
        %443 = vmatpush.bf16.msra.mxu0 0
        %444 = vmatpush.bf16.msra.mxu0 %v390
        %445 = vmatpush.bf16.msra.mxu0 %v388
        %446 = vmatmul.bf16.gmra.mxu0 %v433
        %v447 = vpop.f32.mrf.mxu0
        %v448 = vadd.f32 %v405, %v447
        %v449 = vpop.f32.mrf.mxu0
        %v450 = vadd.f32 %v410, %v449
        %451 = vmatmul.bf16.gmra.mxu0 %v436
        %v452 = vpop.f32.mrf.mxu0
        %v453 = vadd.f32 %v415, %v452
        %v454 = vpop.f32.mrf.mxu0
        %v455 = vadd.f32 %v420, %v454
        %456 = vdwg.mxu0
        %457 = vmatpush.bf16.msra.mxu0 0
        %458 = vmatpush.bf16.msra.mxu0 0
        %459 = vmatpush.bf16.msra.mxu0 0
        %460 = vmatpush.bf16.msra.mxu0 0
        %461 = vmatpush.bf16.msra.mxu0 0
        %462 = vmatpush.bf16.msra.mxu0 0
        %463 = vmatpush.bf16.msra.mxu0 %v391
        %464 = vmatpush.bf16.msra.mxu0 %v389
        %465 = vmatmul.bf16.gmra.mxu0 %v433
        %v466 = vpop.f32.mrf.mxu0
        %v467 = vadd.f32 %v405, %v466
        %v468 = vpop.f32.mrf.mxu0
        %v469 = vadd.f32 %v410, %v468
        %470 = vmatmul.bf16.gmra.mxu0 %v436
        %v471 = vpop.f32.mrf.mxu0
        %v472 = vadd.f32 %v415, %v471
        %v473 = vpop.f32.mrf.mxu0
        %v474 = vadd.f32 %v420, %v473
        %475 = vdwg.mxu0
        %v476 = vmax.f32 %v448, 0.0
        %v477 = vmax.f32 %v467, 0.0
        %v478 = vmax.f32 %v450, 0.0
        %v479 = vmax.f32 %v469, 0.0
        %v480 = vmax.f32 %v453, 0.0
        %v481 = vmax.f32 %v472, 0.0
        %v482 = vmax.f32 %v455, 0.0
        %v483 = vmax.f32 %v474, 0.0
        %v484 = vpack.c.bf16 %v478, %v476
        %v485 = vpack.c.bf16 %v479, %v477
        %v486 = vpack.c.bf16 %v482, %v480
        %v487 = vpack.c.bf16 %v483, %v481
        %v488 = vld [vmem:[%s3] sm:$0x1]
        %s489 = sld [smem:[#allocation2]]
        %v490 = vstv %s489
        %v492 = vsel %vm335, %v488, 0
        %494 = vmatpush.bf16.msra.mxu0 0
        %495 = vmatpush.bf16.msra.mxu0 0
        %496 = vmatpush.bf16.msra.mxu0 0
        %497 = vmatpush.bf16.msra.mxu0 0
        %498 = vmatpush.bf16.msra.mxu0 0
        %499 = vmatpush.bf16.msra.mxu0 0
        %500 = vmatpush.bf16.msra.mxu0 %v486
        %501 = vmatpush.bf16.msra.mxu0 %v484
        %502 = vmatmul.bf16.gmra.mxu0 %v492
        %v503 = vpop.f32.mrf.mxu0
        %v504 = vadd.f32 %v490, %v503
        %v505 = vpop.f32.mrf.mxu0
        %506 = vdwg.mxu0
        %507 = vmatpush.bf16.msra.mxu0 0
        %508 = vmatpush.bf16.msra.mxu0 0
        %509 = vmatpush.bf16.msra.mxu0 0
        %510 = vmatpush.bf16.msra.mxu0 0
        %511 = vmatpush.bf16.msra.mxu0 0
        %512 = vmatpush.bf16.msra.mxu0 0
        %513 = vmatpush.bf16.msra.mxu0 %v487
        %514 = vmatpush.bf16.msra.mxu0 %v485
        %515 = vmatmul.bf16.gmra.mxu0 %v492
        %v516 = vpop.f32.mrf.mxu0
        %v517 = vadd.f32 %v490, %v516
        %v518 = vpop.f32.mrf.mxu0
        %519 = vdwg.mxu0
        %v522 = vrot.slane %v517, 7
        %vm523 = vcmask 1040384
        %v524 = vsel %vm523, %v504, %v522
        %v526 = vlaneseq
        %vm527 = vcmp.ge.s32.totalorder %v526, 0
        %vm528 = vcmp.lt.s32.totalorder %v526, 256
        %vm529 = vmand %vm527, %vm528
        %530 = vst.msk [vmem:[%s260] sm:$0x3] %vm529, %v524
        %s531 = sand.u32 %s155, 1
        %s532 = scalar_lea.sflag [#allocation5], %s531
        %s533 = sand.u32 %s155, 1
        %s534 = smul.addr %s533, 2
        %s535 = scalar_lea.vmem [#allocation6], %s534
        // Predicated region
        $region45: #{tpu_custom_call.1} parent=39 // pred_check
          %p536 = pneg %p165
        $region46: #{tpu_custom_call.1} parent=39 // pred_check_branch
          %538 = sbr.rel (%p536) target = $region48
        $region47: #{tpu_custom_call.1} parent=39 // pred_region
          %s539 = smul.u32 2, %s26
          %541 = vsyncadd %s532, 0
          %s542 = smul.addr %s25, 2
          %s543 = sadd.s32 %s539, %s542
          %s544 = scalar_lea.hbm %s5, %s543
          %s546 = sshll.u32 %s535, 4
          %s547 = int_to_ptr.vmem [resolvable:$true] %s546
          %s548 = sshll.u32 %s544, 4
          %s549 = int_to_ptr.hbm [resolvable:$true] %s548
          %551 = dma.vmem_to_hbm [thread:$0]  %s547, 32, %s549, %s532
        $region48: #{tpu_custom_call.1} parent=39 // pred_fallthru
          _
      $region40: #{tpu_custom_call.1} parent=5 // pred_fallthru
        _
      %p552 = scmp.le.s32.totalorder 2, %s16
      // Predicated region
      $region49: #{tpu_custom_call.1} parent=5 // pred_check
        %p553 = pneg %p552
      $region50: #{tpu_custom_call.1} parent=5 // pred_check_branch
        %555 = sbr.rel (%p553) target = $region52
      $region51: #{tpu_custom_call.1} parent=5 // pred_region
        %s556 = ssub.s32 %s16, 2
        // Predicated region
        $region53: #{tpu_custom_call.1} parent=51 // pred_check
          %p557 = pneg %p171
        $region54: #{tpu_custom_call.1} parent=51 // pred_check_branch
          %559 = sbr.rel (%p557) target = $region56
        $region55: #{tpu_custom_call.1} parent=51 // pred_region
          %s560 = sand.u32 %s156, 1
          %s561 = scalar_lea.sflag [#allocation5], %s560
          %s562 = sand.u32 %s156, 1
          %s563 = smul.addr %s562, 2
          %s564 = scalar_lea.vmem [#allocation6], %s563
          %566 = dma.done %s561, 32
        $region56: #{tpu_custom_call.1} parent=51 // pred_fallthru
          _
      $region52: #{tpu_custom_call.1} parent=5 // pred_fallthru
        _
    $region6: #{tpu_custom_call.1} parent=1 // loop_footer
      %s20 = sadd.s32 1, %s16
    $region7: #{tpu_custom_call.1} parent=1 // loop_footer_branch
      %15 = sbr.rel target = $region3
    $region8: #{tpu_custom_call.1} parent=1 // loop_exit
      _
    %567 = vsyncpa [#allocation4], 1
    %s568 = scalar_lea.sflag [#allocation4], 1
    %569 = vsyncpa %s568, 1
    %570 = vsyncpa [#allocation5], 1
    %s571 = scalar_lea.sflag [#allocation5], 1
    %572 = vsyncpa %s571, 1

</llo_original>
